<compile_context>
chip_gen: v6e
topology: v6e:2x2x1
jax: 0.10.0
libtpu: 0.0.40
codegen_flags: <defaults>
</compile_context>

<pallas_src>
import functools

import jax
import jax.numpy as jnp
import numpy as np
from jax.experimental import pallas as pl
from jax.experimental.pallas import tpu as pltpu


def _dino_loss_kernel(temps_ref,        # SMEM (4,): [1/student_temp, 1/teacher_temp, cm, 1-cm]
                      student_ref,      # VMEM (ncrops*B, D): all student crops, stacked
                      teacher_ref,      # VMEM (2B, D)      : both teacher views
                      center_ref,       # VMEM (1, D)       : current center
                      loss_ref,         # VMEM (1, 1)       : mean loss (output)
                      new_center_ref,   # VMEM (1, D)       : EMA-updated center (output)
                      *, batch, ncrops, n_loss_terms):
    inv_student_temp = temps_ref[0]
    inv_teacher_temp = temps_ref[1]
    center_momentum = temps_ref[2]
    one_minus_cm = temps_ref[3]

    t_full = teacher_ref[...]                                   # (2B, D)
    center = center_ref[...]                                    # (1, D)

    # --- teacher-center EMA update (once) -----------------------------------
    batch_center = jnp.sum(t_full, axis=0, keepdims=True) * jnp.float32(1.0 / (2 * batch))
    new_center_ref[...] = center * center_momentum + batch_center * one_minus_cm

    # --- teacher softmax over both views (computed ONCE) ---------------------
    t = (t_full - center) * inv_teacher_temp                    # (2B, D)
    t_max = jnp.max(t, axis=-1, keepdims=True)
    t_exp = jnp.exp(t - t_max)
    denom = jnp.sum(t_exp, axis=-1, keepdims=True)              # (2B, 1)
    q_all = t_exp * pl.reciprocal(denom, approx=False)          # (2B, D)

    q0 = q_all[:batch, :]                                       # teacher view 0
    q1 = q_all[batch:, :]                                       # teacher view 1
    q_sum = q0 + q1                                             # for crops v >= 2

    # --- per-crop student log-softmax + cross-entropy ------------------------
    total = jnp.float32(0.0)
    inv_batch = jnp.float32(1.0 / batch)
    for v in range(ncrops):                                     # static, unrolled at trace
        s = student_ref[pl.ds(v * batch, batch), :] * inv_student_temp   # (B, D)
        s_max = jnp.max(s, axis=-1, keepdims=True)
        s_shift = s - s_max
        log_z = jnp.log(jnp.sum(jnp.exp(s_shift), axis=-1, keepdims=True))
        log_p = s_shift - log_z                                 # (B, D)

        if v == 0:
            q_eff = q1          # only the other teacher view contributes
        elif v == 1:
            q_eff = q0
        else:
            q_eff = q_sum       # both teacher views contribute -> one fused pass

        # mean_b sum_d(-q * log_p) == -sum_{b,d}(q * log_p) / B
        total = total - jnp.sum(q_eff * log_p) * inv_batch

    loss_ref[...] = jnp.zeros_like(loss_ref) + total * jnp.float32(1.0 / n_loss_terms)


def dino_train_loss(student_output, teacher_output, center,
                    *, ncrops, student_temp, teacher_temp, center_momentum):
    """Returns (total_loss scalar, updated_center (1, D))."""
    total_rows, out_dim = student_output.shape
    assert total_rows % ncrops == 0
    batch = total_rows // ncrops
    assert teacher_output.shape == (2 * batch, out_dim)
    assert center.shape == (1, out_dim)

    n_loss_terms = sum(1 for iq in range(2) for v in range(ncrops) if v != iq)

    # Host-precomputed scalars: reciprocal temps so the kernel only multiplies.
    temps = jnp.array(
        [1.0 / student_temp, 1.0 / teacher_temp, center_momentum, 1.0 - center_momentum],
        dtype=jnp.float32,
    )

    kernel = functools.partial(
        _dino_loss_kernel, batch=batch, ncrops=ncrops, n_loss_terms=n_loss_terms)

    # Single invocation (no grid): all blocks resident in VMEM, teacher softmax
    # and center update computed once, crop loop unrolled in-kernel.
    # NOTE(scale): for DINO-scale out_dim (e.g. 65536) this would need a lane-axis
    # (D) tiled grid with an online softmax and a raised vmem_limit_bytes; at the
    # shapes used here everything fits comfortably in VMEM.
    loss, new_center = pl.pallas_call(
        kernel,
        out_shape=(
            jax.ShapeDtypeStruct((1, 1), jnp.float32),
            jax.ShapeDtypeStruct((1, out_dim), jnp.float32),
        ),
        in_specs=[
            pl.BlockSpec(memory_space=pltpu.MemorySpace.SMEM),   # temps (scalars)
            pl.BlockSpec(memory_space=pltpu.MemorySpace.VMEM),   # student (all crops)
            pl.BlockSpec(memory_space=pltpu.MemorySpace.VMEM),   # teacher (both views)
            pl.BlockSpec(memory_space=pltpu.MemorySpace.VMEM),   # center
        ],
        out_specs=(
            pl.BlockSpec(memory_space=pltpu.MemorySpace.VMEM),   # loss
            pl.BlockSpec(memory_space=pltpu.MemorySpace.VMEM),   # new center
        ),
    )(temps, student_output, teacher_output, center)

    return loss[0, 0], new_center


def _reference(student_output, teacher_output, center,
               *, ncrops, student_temp, temp, center_momentum):
    s = student_output / student_temp
    student_chunks = jnp.split(s, ncrops, axis=0)
    t = jax.nn.softmax((teacher_output - center) / temp, axis=-1)
    teacher_chunks = jnp.split(t, 2, axis=0)
    total, n = 0.0, 0
    for iq, q in enumerate(teacher_chunks):
        for v in range(ncrops):
            if v == iq:
                continue
            logp = jax.nn.log_softmax(student_chunks[v], axis=-1)
            total = total + jnp.mean(jnp.sum(-q * logp, axis=-1))
            n += 1
    total = total / n
    new_center = (center * center_momentum
                  + jnp.mean(teacher_output, axis=0, keepdims=True) * (1.0 - center_momentum))
    return total, new_center


if __name__ == "__main__":
    # Module hyper-parameters (synthetic, deterministic).
    out_dim = 128
    ncrops = 4
    warmup_teacher_temp = 0.04
    teacher_temp = 0.07
    warmup_teacher_temp_epochs = 5
    nepochs = 20
    student_temp = 0.1
    center_momentum = 0.9
    epoch = 3

    # teacher_temp_schedule exactly as in the PyTorch module.
    teacher_temp_schedule = np.concatenate((
        np.linspace(warmup_teacher_temp, teacher_temp, warmup_teacher_temp_epochs),
        np.ones(nepochs - warmup_teacher_temp_epochs) * teacher_temp,
    ))
    temp_at_epoch = float(teacher_temp_schedule[epoch])

    batch = 8
    key = jax.random.PRNGKey(0)
    k_s, k_t = jax.random.split(key)
    student_output = jax.random.normal(k_s, (ncrops * batch, out_dim), dtype=jnp.float32)
    teacher_output = jax.random.normal(k_t, (2 * batch, out_dim), dtype=jnp.float32)
    center = jnp.zeros((1, out_dim), dtype=jnp.float32)   # register_buffer('center', zeros)

    loss, new_center = dino_train_loss(
        student_output, teacher_output, center,
        ncrops=ncrops, student_temp=student_temp,
        teacher_temp=temp_at_epoch, center_momentum=center_momentum,
    )
    jax.block_until_ready((loss, new_center))

    ref_loss, ref_center = _reference(
        student_output, teacher_output, center,
        ncrops=ncrops, student_temp=student_temp,
        temp=temp_at_epoch, center_momentum=center_momentum,
    )

    assert jnp.allclose(loss, ref_loss, rtol=1e-5, atol=1e-5), (loss, ref_loss)
    assert jnp.allclose(new_center, ref_center, rtol=1e-5, atol=1e-5)

    print("KERNEL_OK")
</pallas_src>

<mosaic_0001>
module attributes {stable_mosaic.version = 11 : i64} {
  func.func @_dino_loss_kernel(%arg0: memref<4xf32, #tpu.memory_space<smem>>, %arg1: memref<32x128xf32, #tpu.memory_space<vmem>>, %arg2: memref<16x128xf32, #tpu.memory_space<vmem>>, %arg3: memref<1x128xf32, #tpu.memory_space<vmem>>, %arg4: memref<1x1xf32, #tpu.memory_space<vmem>>, %arg5: memref<1x128xf32, #tpu.memory_space<vmem>>) attributes {dimension_semantics = [], scalar_prefetch = 0 : i64, scratch_operands = 0 : i64, tpu.core_type = #tpu.core_type<tc>} {
    %c0 = arith.constant 0 : index
    %0 = memref.load %arg0[%c0] : memref<4xf32, #tpu.memory_space<smem>>
    %c1 = arith.constant 1 : index
    %1 = memref.load %arg0[%c1] : memref<4xf32, #tpu.memory_space<smem>>
    %c2 = arith.constant 2 : index
    %2 = memref.load %arg0[%c2] : memref<4xf32, #tpu.memory_space<smem>>
    %c3 = arith.constant 3 : index
    %3 = memref.load %arg0[%c3] : memref<4xf32, #tpu.memory_space<smem>>
    %c0_0 = arith.constant 0 : index
    %c0_1 = arith.constant 0 : index
    %4 = vector.load %arg2[%c0_0, %c0_1] : memref<16x128xf32, #tpu.memory_space<vmem>>, vector<16x128xf32>
    %c0_2 = arith.constant 0 : index
    %c0_3 = arith.constant 0 : index
    %5 = vector.load %arg3[%c0_2, %c0_3] : memref<1x128xf32, #tpu.memory_space<vmem>>, vector<1x128xf32>
    %cst = arith.constant dense<0.000000e+00> : vector<128xf32>
    %6 = vector.multi_reduction <add>, %4, %cst [0] : vector<16x128xf32> to vector<128xf32>
    %7 = vector.shape_cast %6 : vector<128xf32> to vector<1x128xf32>
    %cst_4 = arith.constant 6.250000e-02 : f32
    %8 = vector.broadcast %cst_4 : f32 to vector<1x128xf32>
    %9 = arith.mulf %7, %8 : vector<1x128xf32>
    %10 = vector.broadcast %2 : f32 to vector<1x128xf32>
    %11 = arith.mulf %5, %10 : vector<1x128xf32>
    %12 = vector.broadcast %3 : f32 to vector<1x128xf32>
    %13 = arith.mulf %9, %12 : vector<1x128xf32>
    %14 = arith.addf %11, %13 : vector<1x128xf32>
    %c0_5 = arith.constant 0 : index
    %c0_6 = arith.constant 0 : index
    %15 = vector.load %arg5[%c0_5, %c0_6] : memref<1x128xf32, #tpu.memory_space<vmem>>, vector<1x128xf32>
    tpu.vector_store %arg5[%c0_5, %c0_6], %14 {strides = array<i32>} : memref<1x128xf32, #tpu.memory_space<vmem>>, vector<1x128xf32>,
    %16 = vector.broadcast %5 : vector<1x128xf32> to vector<16x128xf32>
    %17 = arith.subf %4, %16 : vector<16x128xf32>
    %18 = vector.broadcast %1 : f32 to vector<16x128xf32>
    %19 = arith.mulf %17, %18 : vector<16x128xf32>
    %cst_7 = arith.constant dense<0xFF800000> : vector<16xf32>
    %20 = vector.multi_reduction <maximumf>, %19, %cst_7 [1] : vector<16x128xf32> to vector<16xf32>
    %21 = vector.shape_cast %20 : vector<16xf32> to vector<16x1xf32>
    %22 = vector.broadcast %21 : vector<16x1xf32> to vector<16x128xf32>
    %23 = arith.subf %19, %22 : vector<16x128xf32>
    %24 = math.exp %23 : vector<16x128xf32>
    %cst_8 = arith.constant dense<0.000000e+00> : vector<16xf32>
    %25 = vector.multi_reduction <add>, %24, %cst_8 [1] : vector<16x128xf32> to vector<16xf32>
    %26 = vector.shape_cast %25 : vector<16xf32> to vector<16x1xf32>
    %27 = tpu.reciprocal %26 : vector<16x1xf32> -> vector<16x1xf32>
    %28 = vector.broadcast %27 : vector<16x1xf32> to vector<16x128xf32>
    %29 = arith.mulf %24, %28 : vector<16x128xf32>
    %30 = vector.extract_strided_slice %29 {offsets = [0, 0], sizes = [8, 128], strides = [1, 1]} : vector<16x128xf32> to vector<8x128xf32>
    %31 = vector.extract_strided_slice %29 {offsets = [8, 0], sizes = [8, 128], strides = [1, 1]} : vector<16x128xf32> to vector<8x128xf32>
    %32 = arith.addf %30, %31 : vector<8x128xf32>
    %c0_9 = arith.constant 0 : index
    %c0_10 = arith.constant 0 : index
    %33 = vector.load %arg1[%c0_9, %c0_10] : memref<32x128xf32, #tpu.memory_space<vmem>>, vector<8x128xf32>
    %34 = vector.broadcast %0 : f32 to vector<8x128xf32>
    %35 = arith.mulf %33, %34 : vector<8x128xf32>
    %cst_11 = arith.constant dense<0xFF800000> : vector<8xf32>
    %36 = vector.multi_reduction <maximumf>, %35, %cst_11 [1] : vector<8x128xf32> to vector<8xf32>
    %37 = vector.shape_cast %36 : vector<8xf32> to vector<8x1xf32>
    %38 = vector.broadcast %37 : vector<8x1xf32> to vector<8x128xf32>
    %39 = arith.subf %35, %38 : vector<8x128xf32>
    %40 = math.exp %39 : vector<8x128xf32>
    %cst_12 = arith.constant dense<0.000000e+00> : vector<8xf32>
    %41 = vector.multi_reduction <add>, %40, %cst_12 [1] : vector<8x128xf32> to vector<8xf32>
    %42 = vector.shape_cast %41 : vector<8xf32> to vector<8x1xf32>
    %43 = math.log %42 : vector<8x1xf32>
    %44 = vector.broadcast %43 : vector<8x1xf32> to vector<8x128xf32>
    %45 = arith.subf %39, %44 : vector<8x128xf32>
    %46 = arith.mulf %31, %45 : vector<8x128xf32>
    %47 = vector.shape_cast %46 : vector<8x128xf32> to vector<1x8x128xf32>
    %cst_13 = arith.constant dense<0.000000e+00> : vector<1xf32>
    %48 = vector.multi_reduction <add>, %47, %cst_13 [1, 2] : vector<1x8x128xf32> to vector<1xf32>
    %49 = vector.shape_cast %48 : vector<1xf32> to vector<1x1x1xf32>
    %50 = vector.extract %49[0, 0, 0] : f32 from vector<1x1x1xf32>
    %cst_14 = arith.constant 1.250000e-01 : f32
    %51 = arith.mulf %50, %cst_14 : f32
    %cst_15 = arith.constant 0.000000e+00 : f32
    %52 = arith.subf %cst_15, %51 : f32
    %c8 = arith.constant 8 : index
    %c0_16 = arith.constant 0 : index
    %53 = vector.load %arg1[%c8, %c0_16] : memref<32x128xf32, #tpu.memory_space<vmem>>, vector<8x128xf32>
    %54 = vector.broadcast %0 : f32 to vector<8x128xf32>
    %55 = arith.mulf %53, %54 : vector<8x128xf32>
    %cst_17 = arith.constant dense<0xFF800000> : vector<8xf32>
    %56 = vector.multi_reduction <maximumf>, %55, %cst_17 [1] : vector<8x128xf32> to vector<8xf32>
    %57 = vector.shape_cast %56 : vector<8xf32> to vector<8x1xf32>
    %58 = vector.broadcast %57 : vector<8x1xf32> to vector<8x128xf32>
    %59 = arith.subf %55, %58 : vector<8x128xf32>
    %60 = math.exp %59 : vector<8x128xf32>
    %cst_18 = arith.constant dense<0.000000e+00> : vector<8xf32>
    %61 = vector.multi_reduction <add>, %60, %cst_18 [1] : vector<8x128xf32> to vector<8xf32>
    %62 = vector.shape_cast %61 : vector<8xf32> to vector<8x1xf32>
    %63 = math.log %62 : vector<8x1xf32>
    %64 = vector.broadcast %63 : vector<8x1xf32> to vector<8x128xf32>
    %65 = arith.subf %59, %64 : vector<8x128xf32>
    %66 = arith.mulf %30, %65 : vector<8x128xf32>
    %67 = vector.shape_cast %66 : vector<8x128xf32> to vector<1x8x128xf32>
    %cst_19 = arith.constant dense<0.000000e+00> : vector<1xf32>
    %68 = vector.multi_reduction <add>, %67, %cst_19 [1, 2] : vector<1x8x128xf32> to vector<1xf32>
    %69 = vector.shape_cast %68 : vector<1xf32> to vector<1x1x1xf32>
    %70 = vector.extract %69[0, 0, 0] : f32 from vector<1x1x1xf32>
    %cst_20 = arith.constant 1.250000e-01 : f32
    %71 = arith.mulf %70, %cst_20 : f32
    %72 = arith.subf %52, %71 : f32
    %c16 = arith.constant 16 : index
    %c0_21 = arith.constant 0 : index
    %73 = vector.load %arg1[%c16, %c0_21] : memref<32x128xf32, #tpu.memory_space<vmem>>, vector<8x128xf32>
    %74 = vector.broadcast %0 : f32 to vector<8x128xf32>
    %75 = arith.mulf %73, %74 : vector<8x128xf32>
    %cst_22 = arith.constant dense<0xFF800000> : vector<8xf32>
    %76 = vector.multi_reduction <maximumf>, %75, %cst_22 [1] : vector<8x128xf32> to vector<8xf32>
    %77 = vector.shape_cast %76 : vector<8xf32> to vector<8x1xf32>
    %78 = vector.broadcast %77 : vector<8x1xf32> to vector<8x128xf32>
    %79 = arith.subf %75, %78 : vector<8x128xf32>
    %80 = math.exp %79 : vector<8x128xf32>
    %cst_23 = arith.constant dense<0.000000e+00> : vector<8xf32>
    %81 = vector.multi_reduction <add>, %80, %cst_23 [1] : vector<8x128xf32> to vector<8xf32>
    %82 = vector.shape_cast %81 : vector<8xf32> to vector<8x1xf32>
    %83 = math.log %82 : vector<8x1xf32>
    %84 = vector.broadcast %83 : vector<8x1xf32> to vector<8x128xf32>
    %85 = arith.subf %79, %84 : vector<8x128xf32>
    %86 = arith.mulf %32, %85 : vector<8x128xf32>
    %87 = vector.shape_cast %86 : vector<8x128xf32> to vector<1x8x128xf32>
    %cst_24 = arith.constant dense<0.000000e+00> : vector<1xf32>
    %88 = vector.multi_reduction <add>, %87, %cst_24 [1, 2] : vector<1x8x128xf32> to vector<1xf32>
    %89 = vector.shape_cast %88 : vector<1xf32> to vector<1x1x1xf32>
    %90 = vector.extract %89[0, 0, 0] : f32 from vector<1x1x1xf32>
    %cst_25 = arith.constant 1.250000e-01 : f32
    %91 = arith.mulf %90, %cst_25 : f32
    %92 = arith.subf %72, %91 : f32
    %c24 = arith.constant 24 : index
    %c0_26 = arith.constant 0 : index
    %93 = vector.load %arg1[%c24, %c0_26] : memref<32x128xf32, #tpu.memory_space<vmem>>, vector<8x128xf32>
    %94 = vector.broadcast %0 : f32 to vector<8x128xf32>
    %95 = arith.mulf %93, %94 : vector<8x128xf32>
    %cst_27 = arith.constant dense<0xFF800000> : vector<8xf32>
    %96 = vector.multi_reduction <maximumf>, %95, %cst_27 [1] : vector<8x128xf32> to vector<8xf32>
    %97 = vector.shape_cast %96 : vector<8xf32> to vector<8x1xf32>
    %98 = vector.broadcast %97 : vector<8x1xf32> to vector<8x128xf32>
    %99 = arith.subf %95, %98 : vector<8x128xf32>
    %100 = math.exp %99 : vector<8x128xf32>
    %cst_28 = arith.constant dense<0.000000e+00> : vector<8xf32>
    %101 = vector.multi_reduction <add>, %100, %cst_28 [1] : vector<8x128xf32> to vector<8xf32>
    %102 = vector.shape_cast %101 : vector<8xf32> to vector<8x1xf32>
    %103 = math.log %102 : vector<8x1xf32>
    %104 = vector.broadcast %103 : vector<8x1xf32> to vector<8x128xf32>
    %105 = arith.subf %99, %104 : vector<8x128xf32>
    %106 = arith.mulf %32, %105 : vector<8x128xf32>
    %107 = vector.shape_cast %106 : vector<8x128xf32> to vector<1x8x128xf32>
    %cst_29 = arith.constant dense<0.000000e+00> : vector<1xf32>
    %108 = vector.multi_reduction <add>, %107, %cst_29 [1, 2] : vector<1x8x128xf32> to vector<1xf32>
    %109 = vector.shape_cast %108 : vector<1xf32> to vector<1x1x1xf32>
    %110 = vector.extract %109[0, 0, 0] : f32 from vector<1x1x1xf32>
    %cst_30 = arith.constant 1.250000e-01 : f32
    %111 = arith.mulf %110, %cst_30 : f32
    %112 = arith.subf %92, %111 : f32
    %cst_31 = arith.constant 0.000000e+00 : f32
    %113 = vector.broadcast %cst_31 : f32 to vector<1x1xf32>
    %cst_32 = arith.constant 0.166666672 : f32
    %114 = arith.mulf %112, %cst_32 : f32
    %115 = vector.broadcast %114 : f32 to vector<1x1xf32>
    %116 = arith.addf %113, %115 : vector<1x1xf32>
    %c0_33 = arith.constant 0 : index
    %c0_34 = arith.constant 0 : index
    %117 = vector.load %arg4[%c0_33, %c0_34] : memref<1x1xf32, #tpu.memory_space<vmem>>, vector<1x1xf32>
    tpu.vector_store %arg4[%c0_33, %c0_34], %116 {strides = array<i32>} : memref<1x1xf32, #tpu.memory_space<vmem>>, vector<1x1xf32>,
    return
  }
}

</mosaic_0001>

<llo_original>
// kernel: tpu_custom_call.1
$region0: #{tpu_custom_call.1}
  #allocation0 [shape = 'u32[]', space=smem, size = 0x4, offset = 0x4, fixed_abs, tag = 'smem constant byte address 0x4 - core index']
  #allocation1 [shape = 'u32[144,128]{1,0:T(1,128)}', space=vmem, size = 0x12000, scoped, tag = 'internal scratch']
  %s0 = inlined_call_operand.hbm [shape: f32[4], index: 0, kind: input, shape index: {}]
  %s1 = inlined_call_operand.hbm [shape: f32[32,128], index: 1, kind: input, shape index: {}]
  %s2 = inlined_call_operand.hbm [shape: f32[16,128], index: 2, kind: input, shape index: {}]
  %s3 = inlined_call_operand.vmem [shape: f32[1,128], index: 3, kind: input, shape index: {}]
  %s4 = inlined_call_operand.hbm [shape: f32[1,1], index: 4, kind: output, shape index: {0}]
  %s5 = inlined_call_operand.hbm [shape: f32[1,128], index: 5, kind: output, shape index: {1}]
  %6 = xla_tuple %s4, %s5
  %s7 = sld [smem:[#allocation0]]
  $region46: #{tpu_custom_call.1} parent=0
    _
  %s9 = ssub.s32 1, %s7
  %s10 = scalar_select 0, %s9, %s7
  $region1: #{tpu_custom_call.1} parent=0
    #allocation2 [shape = 'u8[512]{0}', space=smem, size = 0x200, scoped, tag = 'input window, operand 0, single buffered']
    #allocation3 [shape = 's32[1]{0}', space=sflag, size = 0x4, scoped, tag = 'scoped memory for tpu_custom_call.1']
    #allocation4 [shape = 's32[1]{0}', space=sflag, size = 0x4, scoped, tag = 'scoped memory for tpu_custom_call.1']
    #allocation5 [shape = 's32[1]{0}', space=sflag, size = 0x4, scoped, tag = 'scoped memory for tpu_custom_call.1']
    #allocation6 [shape = 'u8[16384]{0}', space=vmem, size = 0x4000, scoped, tag = 'input window, operand 1, single buffered']
    #allocation7 [shape = 'u8[8192]{0}', space=vmem, size = 0x2000, scoped, tag = 'input window, operand 2, single buffered']
    #allocation8 [shape = 's32[1]{0}', space=sflag, size = 0x4, scoped, tag = 'scoped memory for tpu_custom_call.1']
    #allocation9 [shape = 'u8[512]{0}', space=vmem, size = 0x400, scoped, tag = 'output window, operand 0, single buffered']
    #allocation10 [shape = 'u8[512]{0}', space=vmem, size = 0x400, scoped, tag = 'output window, operand 1, single buffered']
    #allocation11 [shape = 's32[1]{0}', space=sflag, size = 0x4, scoped, tag = 'scoped memory for tpu_custom_call.1']
    %11 = vsyncpa [#allocation5], 0
    %12 = vsyncpa [#allocation3], 0
    %13 = vsyncpa [#allocation8], 0
    %14 = vsyncpa [#allocation4], 0
    %15 = vsyncpa [#allocation11], 0
    // Predicated region
    $region2: #{tpu_custom_call.1} parent=1 // pred_check
      _
    $region3: #{tpu_custom_call.1} parent=1 // pred_check_branch
      %17 = sbr.rel (0) target = $region5
    $region4: #{tpu_custom_call.1} parent=1 // pred_region
      %s19 = ssub.s32 16, 16
      %20 = vsyncadd [#allocation5], %s19
      %23 = dma.hbm_to_smem %s0, 16, [#allocation2], [#allocation5]
    $region5: #{tpu_custom_call.1} parent=1 // pred_fallthru
      _
    // Predicated region
    $region6: #{tpu_custom_call.1} parent=1 // pred_check
      _
    $region7: #{tpu_custom_call.1} parent=1 // pred_check_branch
      %25 = sbr.rel (0) target = $region9
    $region8: #{tpu_custom_call.1} parent=1 // pred_region
      %s27 = ssub.s32 512, 512
      %28 = vsyncadd [#allocation3], %s27
      %s29 = sshll.u32 [#allocation6], 4
      %s30 = int_to_ptr.vmem [resolvable:$true] %s29
      %35 = dma.hbm_to_vmem [thread:$0]  %s1, 512, %s30, [#allocation3], 128, 128, 8
    $region9: #{tpu_custom_call.1} parent=1 // pred_fallthru
      _
    // Predicated region
    $region10: #{tpu_custom_call.1} parent=1 // pred_check
      _
    $region11: #{tpu_custom_call.1} parent=1 // pred_check_branch
      %37 = sbr.rel (0) target = $region13
    $region12: #{tpu_custom_call.1} parent=1 // pred_region
      %s39 = ssub.s32 256, 256
      %40 = vsyncadd [#allocation8], %s39
      %s41 = sshll.u32 [#allocation7], 4
      %s42 = int_to_ptr.vmem [resolvable:$true] %s41
      %47 = dma.hbm_to_vmem [thread:$0]  %s2, 256, %s42, [#allocation8], 128, 128, 8
    $region13: #{tpu_custom_call.1} parent=1 // pred_fallthru
      _
    // Predicated region
    $region14: #{tpu_custom_call.1} parent=1 // pred_check
      _
    $region15: #{tpu_custom_call.1} parent=1 // pred_check_branch
      %49 = sbr.rel (0) target = $region17
    $region16: #{tpu_custom_call.1} parent=1 // pred_region
      _
    $region17: #{tpu_custom_call.1} parent=1 // pred_fallthru
      _
    // Predicated region
    $region18: #{tpu_custom_call.1} parent=1 // pred_check
      _
    $region19: #{tpu_custom_call.1} parent=1 // pred_check_branch
      %51 = sbr.rel (0) target = $region21
    $region20: #{tpu_custom_call.1} parent=1 // pred_region
      %52 = dma.done [#allocation5], 16
    $region21: #{tpu_custom_call.1} parent=1 // pred_fallthru
      _
    // Predicated region
    $region22: #{tpu_custom_call.1} parent=1 // pred_check
      _
    $region23: #{tpu_custom_call.1} parent=1 // pred_check_branch
      %54 = sbr.rel (0) target = $region25
    $region24: #{tpu_custom_call.1} parent=1 // pred_region
      %55 = dma.done [#allocation3], 512
    $region25: #{tpu_custom_call.1} parent=1 // pred_fallthru
      _
    // Predicated region
    $region26: #{tpu_custom_call.1} parent=1 // pred_check
      _
    $region27: #{tpu_custom_call.1} parent=1 // pred_check_branch
      %57 = sbr.rel (0) target = $region29
    $region28: #{tpu_custom_call.1} parent=1 // pred_region
      %58 = dma.done [#allocation8], 256
    $region29: #{tpu_custom_call.1} parent=1 // pred_fallthru
      _
    %59 = sfence
    %s60 = sld [smem:[#allocation2]]
    %s61 = sld [smem:[#allocation2 + $0x1]]
    %s62 = sld [smem:[#allocation2 + $0x2]]
    %s63 = sld [smem:[#allocation2 + $0x3]]
    %v64 = vld [vmem:[#allocation7] sm:$0xff]
    %v65 = vld [vmem:[#allocation7 + $0x8] sm:$0xff]
    %v66 = vld [vmem:[%s3] sm:$0x1]
    %v67 = vadd.f32 %v64, %v65
    %v68 = vrot.slane %v67, 4
    %v69 = vadd.f32 %v67, %v68
    %v70 = vrot.slane %v69, 2
    %v71 = vadd.f32 %v69, %v70
    %v72 = vrot.slane %v71, 1
    %v73 = vadd.f32 %v71, %v72
    %v74 = vmul.f32 %v73, 0.0625
    %v75 = vstv %s62
    %v76 = vmul.f32 %v66, %v75
    %v77 = vstv %s63
    %v78 = vmul.f32 %v74, %v77
    %v79 = vadd.f32 %v76, %v78
    %80 = vst [vmem:[#allocation10] sm:$0x1] %v79
    %v82 = vlaneseq
    %v83 = vshrl.u32 %v82, 7
    %v84 = vsub.s32 0, %v83
    %v85 = vrot.slane %v66, %v84
    %v87 = vsub.f32 %v64, %v85
    %v88 = vsub.f32 %v65, %v85
    %v89 = vstv %s61
    %v90 = vmul.f32 %v87, %v89
    %v91 = vmul.f32 %v88, %v89
    %92 = vmax.xlane.f32.xlu0 %v90
    %v93 = vpop.xlane.xlu0 %92
    %94 = vmax.xlane.f32.xlu0 %v91
    %v95 = vpop.xlane.xlu0 %94
    %v96 = vsub.f32 %v90, %v93
    %v97 = vsub.f32 %v91, %v95
    %v98 = vmul.f32 %v96, 1.442695
    %v99 = vpow.pop %v98
    %v100 = vmul.f32 %v97, 1.442695
    %v101 = vpow.pop %v100
    %102 = vadd.xlane.f32.xlu0 %v99
    %v103 = vpop.xlane.xlu0 %102
    %104 = vadd.xlane.f32.xlu0 %v101
    %v105 = vpop.xlane.xlu0 %104
    %v106 = vrcp.pop %v103
    %v107 = vrcp.pop %v105
    %v108 = vmul.f32 %v99, %v106
    %v109 = vmul.f32 %v101, %v107
    %v110 = vadd.f32 %v108, %v109
    %v111 = vld [vmem:[#allocation6] sm:$0xff]
    %v112 = vstv %s60
    %v113 = vmul.f32 %v111, %v112
    %114 = vmax.xlane.f32.xlu0 %v113
    %v115 = vpop.xlane.xlu0 %114
    %v116 = vsub.f32 %v113, %v115
    %v117 = vmul.f32 %v116, 1.442695
    %v118 = vpow.pop %v117
    %119 = vadd.xlane.f32.xlu0 %v118
    %v120 = vpop.xlane.xlu0 %119
    %v121 = vlog2.pop %v120
    %v122 = vmul.f32 %v121, 0.6931472
    %v123 = vsub.f32 %v116, %v122
    %v124 = vmul.f32 %v109, %v123
    %125 = vadd.xlane.f32.xlu0 %v124
    %v126 = vpop.xlane.xlu0 %125
    %v127 = vrot.slane %v126, 4
    %v128 = vadd.f32 %v126, %v127
    %v129 = vrot.slane %v128, 2
    %v130 = vadd.f32 %v128, %v129
    %v131 = vrot.slane %v130, 1
    %v132 = vadd.f32 %v130, %v131
    %s133 = vtos %v132
    %s134 = smul.f32 %s133, 0.125
    %s135 = ssub.f32 0.0, %s134
    %v136 = vld [vmem:[#allocation6 + $0x8] sm:$0xff]
    %v137 = vmul.f32 %v136, %v112
    %138 = vmax.xlane.f32.xlu0 %v137
    %v139 = vpop.xlane.xlu0 %138
    %v140 = vsub.f32 %v137, %v139
    %v141 = vmul.f32 %v140, 1.442695
    %v142 = vpow.pop %v141
    %143 = vadd.xlane.f32.xlu0 %v142
    %v144 = vpop.xlane.xlu0 %143
    %v145 = vlog2.pop %v144
    %v146 = vmul.f32 %v145, 0.6931472
    %v147 = vsub.f32 %v140, %v146
    %v148 = vmul.f32 %v108, %v147
    %149 = vadd.xlane.f32.xlu0 %v148
    %v150 = vpop.xlane.xlu0 %149
    %v151 = vrot.slane %v150, 4
    %v152 = vadd.f32 %v150, %v151
    %v153 = vrot.slane %v152, 2
    %v154 = vadd.f32 %v152, %v153
    %v155 = vrot.slane %v154, 1
    %v156 = vadd.f32 %v154, %v155
    %s157 = vtos %v156
    %s158 = smul.f32 %s157, 0.125
    %s159 = ssub.f32 %s135, %s158
    %v160 = vld [vmem:[#allocation6 + $0x10] sm:$0xff]
    %v161 = vmul.f32 %v160, %v112
    %162 = vmax.xlane.f32.xlu0 %v161
    %v163 = vpop.xlane.xlu0 %162
    %v164 = vsub.f32 %v161, %v163
    %v165 = vmul.f32 %v164, 1.442695
    %v166 = vpow.pop %v165
    %167 = vadd.xlane.f32.xlu0 %v166
    %v168 = vpop.xlane.xlu0 %167
    %v169 = vlog2.pop %v168
    %v170 = vmul.f32 %v169, 0.6931472
    %v171 = vsub.f32 %v164, %v170
    %v172 = vmul.f32 %v110, %v171
    %173 = vadd.xlane.f32.xlu0 %v172
    %v174 = vpop.xlane.xlu0 %173
    %v175 = vrot.slane %v174, 4
    %v176 = vadd.f32 %v174, %v175
    %v177 = vrot.slane %v176, 2
    %v178 = vadd.f32 %v176, %v177
    %v179 = vrot.slane %v178, 1
    %v180 = vadd.f32 %v178, %v179
    %s181 = vtos %v180
    %s182 = smul.f32 %s181, 0.125
    %s183 = ssub.f32 %s159, %s182
    %v184 = vld [vmem:[#allocation6 + $0x18] sm:$0xff]
    %v185 = vmul.f32 %v184, %v112
    %186 = vmax.xlane.f32.xlu0 %v185
    %v187 = vpop.xlane.xlu0 %186
    %v188 = vsub.f32 %v185, %v187
    %v189 = vmul.f32 %v188, 1.442695
    %v190 = vpow.pop %v189
    %191 = vadd.xlane.f32.xlu0 %v190
    %v192 = vpop.xlane.xlu0 %191
    %v193 = vlog2.pop %v192
    %v194 = vmul.f32 %v193, 0.6931472
    %v195 = vsub.f32 %v188, %v194
    %v196 = vmul.f32 %v110, %v195
    %197 = vadd.xlane.f32.xlu0 %v196
    %v198 = vpop.xlane.xlu0 %197
    %v199 = vrot.slane %v198, 4
    %v200 = vadd.f32 %v198, %v199
    %v201 = vrot.slane %v200, 2
    %v202 = vadd.f32 %v200, %v201
    %v203 = vrot.slane %v202, 1
    %v204 = vadd.f32 %v202, %v203
    %s205 = vtos %v204
    %s206 = smul.f32 %s205, 0.125
    %s207 = ssub.f32 %s183, %s206
    %s208 = smul.f32 %s207, 0.16666667
    %v209 = vstv %s208
    %v210 = vadd.f32 %v209, 0.0
    %vm211 = vcmask 0
    %212 = vst.msk [vmem:[#allocation9] sm:$0x1] %vm211, %v210
    // Predicated region
    $region30: #{tpu_custom_call.1} parent=1 // pred_check
      _
    $region31: #{tpu_custom_call.1} parent=1 // pred_check_branch
      %214 = sbr.rel (0) target = $region33
    $region32: #{tpu_custom_call.1} parent=1 // pred_region
      %s216 = ssub.s32 16, 16
      %217 = vsyncadd [#allocation4], %s216
      %s219 = sshll.u32 [#allocation9], 4
      %s220 = int_to_ptr.vmem [resolvable:$true] %s219
      %222 = dma.vmem_to_hbm [thread:$0]  %s220, 16, %s4, [#allocation4]
    $region33: #{tpu_custom_call.1} parent=1 // pred_fallthru
      _
    // Predicated region
    $region34: #{tpu_custom_call.1} parent=1 // pred_check
      _
    $region35: #{tpu_custom_call.1} parent=1 // pred_check_branch
      %224 = sbr.rel (0) target = $region37
    $region36: #{tpu_custom_call.1} parent=1 // pred_region
      %s226 = ssub.s32 16, 16
      %227 = vsyncadd [#allocation11], %s226
      %s229 = sshll.u32 [#allocation10], 4
      %s230 = int_to_ptr.vmem [resolvable:$true] %s229
      %232 = dma.vmem_to_hbm [thread:$0]  %s230, 16, %s5, [#allocation11]
    $region37: #{tpu_custom_call.1} parent=1 // pred_fallthru
      _
    // Predicated region
    $region38: #{tpu_custom_call.1} parent=1 // pred_check
      _
    $region39: #{tpu_custom_call.1} parent=1 // pred_check_branch
      %234 = sbr.rel (0) target = $region41
    $region40: #{tpu_custom_call.1} parent=1 // pred_region
      %235 = dma.done [#allocation4], 16
    $region41: #{tpu_custom_call.1} parent=1 // pred_fallthru
      _
    // Predicated region
    $region42: #{tpu_custom_call.1} parent=1 // pred_check
      _
    $region43: #{tpu_custom_call.1} parent=1 // pred_check_branch
      %237 = sbr.rel (0) target = $region45
    $region44: #{tpu_custom_call.1} parent=1 // pred_region
      %238 = dma.done [#allocation11], 16
    $region45: #{tpu_custom_call.1} parent=1 // pred_fallthru
      _
    %239 = vsyncpa [#allocation3], 1
    %240 = vsyncpa [#allocation8], 1
    %241 = vsyncpa [#allocation4], 1
    %242 = vsyncpa [#allocation11], 1
    %243 = vsyncpa [#allocation5], 1

</llo_original>
